<compile_context>
chip_gen: v7x
topology: tpu7x:2x2x1
jax: 0.10.0
libtpu: 0.0.40
codegen_flags: <defaults>
</compile_context>

<pallas_src>
import functools

import jax
import jax.numpy as jnp
from jax.experimental import pallas as pl
from jax.experimental.pallas import tpu as pltpu

EPS = 1e-5  # nn.LayerNorm default


def _residual_kernel(x_ref, w_ref, params_ref, o_ref):
    """Fused: y = LayerNorm(x + (x @ W + b)) over the last (hidden) axis."""
    x = x_ref[...]  # native dtype (e.g. bf16) fed straight to the MXU

    # sublayer: linear projection, f32 accumulation on the MXU
    sub = jnp.dot(x, w_ref[...], preferred_element_type=jnp.float32)

    p = params_ref[...].astype(jnp.float32)      # (3, dim): bias, gamma, beta
    bias, gamma, beta = p[0], p[1], p[2]
    sub = sub + bias

    # TODO(synk): dropout is eval-mode identity here; training-mode dropout
    # would use pltpu.prng_seed + pltpu.stateful_bernoulli + 1/(1-p) scaling.
    y = x.astype(jnp.float32) + sub              # residual + LayerNorm in f32

    # LayerNorm, two-pass statistics (no E[y^2]-E[y]^2 cancellation risk).
    inv_d = jnp.float32(1.0 / y.shape[-1])
    mean = jnp.sum(y, axis=-1, keepdims=True) * inv_d
    centered = y - mean
    var = jnp.sum(centered * centered, axis=-1, keepdims=True) * inv_d
    normed = centered * jax.lax.rsqrt(var + EPS)

    o_ref[...] = (normed * gamma + beta).astype(o_ref.dtype)


def _vmem_cap_bytes():
    """Per-generation VMEM capacity with ~25% headroom; safe fallback 64 MiB."""
    try:
        cap = pltpu.get_tpu_info().vmem_capacity_bytes
    except Exception:  # info not available (e.g. interpret mode) -> be safe
        cap = 64 << 20
    return int(cap * 0.75)


@functools.partial(jax.jit, static_argnames=("tile_rows",))
def _residual_call(x, w, params, *, tile_rows):
    rows, dim = x.shape  # rows already padded to a multiple of tile_rows
    grid = (rows // tile_rows,)

    # VMEM budget: double-buffered bf16 x/out tiles + resident params +
    # f32 intermediates (sub, y, centered, normed + slack) + compiler scratch.
    act_bytes = tile_rows * dim * x.dtype.itemsize
    f32_tile = tile_rows * dim * 4
    vmem_need = (4 * act_bytes                      # x + out, double-buffered
                 + 6 * f32_tile                     # f32 temporaries headroom
                 + w.size * w.dtype.itemsize        # resident weight
                 + params.size * params.dtype.itemsize
                 + (2 << 20))                       # compiler scratch slack
    vmem_limit = int(max(min(vmem_need, _vmem_cap_bytes()), 16 << 20))

    cost = pl.CostEstimate(
        flops=2 * rows * dim * dim + 12 * rows * dim,
        transcendentals=rows,  # one rsqrt per row
        bytes_accessed=(2 * rows * dim * x.dtype.itemsize
                        + w.size * w.dtype.itemsize
                        + params.size * params.dtype.itemsize),
    )

    resident = pl.BlockSpec(memory_space=pltpu.MemorySpace.VMEM)

    # TODO(synk): for very large `dim` (resident bf16 weight >= ~24-32 MiB on
    # v7x) add an N-tiled grid axis over weight columns with partial LN stats
    # accumulated in scratch and finalized under pl.when(last N step).
    return pl.pallas_call(
        _residual_kernel,
        out_shape=jax.ShapeDtypeStruct((rows, dim), x.dtype),
        grid_spec=pltpu.PrefetchScalarGridSpec(
            num_scalar_prefetch=0,
            grid=grid,
            in_specs=[
                pl.BlockSpec((tile_rows, dim), lambda i: (i, 0)),  # x tile
                resident,   # sublayer weight (whole array, single-buffered)
                resident,   # packed (bias, gamma, beta)
            ],
            out_specs=pl.BlockSpec((tile_rows, dim), lambda i: (i, 0)),
        ),
        compiler_params=pltpu.CompilerParams(
            dimension_semantics=("parallel",),
            vmem_limit_bytes=vmem_limit,
        ),
        cost_estimate=cost,
    )(x, w, params)


def residual_forward(x, w, b, gamma, beta, *, tile_rows=512):
    """x: [rows, dim] (rows = batch*seq). Returns LayerNorm(x + (x@W + b))."""
    rows, dim = x.shape

    # Tile-size selection:
    #  * never larger than rows,
    #  * >= 2 grid steps when rows permit, so v7x's 2 TensorCores both work
    #    (on v5e/v6e the extra step costs only ~0.35 us),
    #  * multiple of 8 (sublane alignment).
    tile = max(8, min(tile_rows, rows))
    if rows >= 16:
        half = max(8, -(-(rows // 2) // 8) * 8)   # ceil(rows/2) to mult. of 8
        tile = min(tile, half)
    tile = max(8, (tile // 8) * 8)

    # Pad rows to a tile multiple (zero rows are harmless: LN of a constant
    # row is finite thanks to EPS) and slice the result back.
    rows_padded = pl.cdiv(rows, tile) * tile
    x_padded = x if rows_padded == rows else jnp.pad(
        x, ((0, rows_padded - rows), (0, 0)))

    # Pack the small per-channel params into one resident (3, dim) f32 block.
    params = jnp.stack([
        b.reshape(dim).astype(jnp.float32),
        gamma.reshape(dim).astype(jnp.float32),
        beta.reshape(dim).astype(jnp.float32),
    ], axis=0)

    out = _residual_call(x_padded, w, params, tile_rows=tile)
    return out[:rows] if rows_padded != rows else out


def _reference(x, w, b, gamma, beta):
    xf = x.astype(jnp.float32)
    sub = xf @ w.astype(jnp.float32) + b.reshape(1, -1).astype(jnp.float32)
    y = xf + sub
    mean = jnp.mean(y, axis=-1, keepdims=True)
    var = jnp.mean((y - mean) ** 2, axis=-1, keepdims=True)
    normed = (y - mean) * jax.lax.rsqrt(var + EPS)
    return (normed * gamma.reshape(1, -1).astype(jnp.float32)
            + beta.reshape(1, -1).astype(jnp.float32))


if __name__ == "__main__":
    batch, seq, dim = 2, 256, 128  # rows = 512, hidden = 128 (lane-dense)
    key = jax.random.PRNGKey(0)
    kx, kw, kb, kg, kbeta = jax.random.split(key, 5)

    # bf16 activations / weights (MXU-native); LayerNorm params in f32
    x = jax.random.normal(kx, (batch, seq, dim), dtype=jnp.float32).astype(jnp.bfloat16)
    w = (jax.random.normal(kw, (dim, dim), dtype=jnp.float32)
         * (1.0 / jnp.sqrt(dim))).astype(jnp.bfloat16)
    b = jax.random.normal(kb, (dim,), dtype=jnp.float32) * 0.01
    gamma = jnp.ones((dim,), jnp.float32) + 0.1 * jax.random.normal(kg, (dim,))
    beta = 0.1 * jax.random.normal(kbeta, (dim,), dtype=jnp.float32)

    x2d = x.reshape(batch * seq, dim)
    out = residual_forward(x2d, w, b, gamma, beta, tile_rows=512)
    out = jax.block_until_ready(out)

    ref = _reference(x2d, w, b, gamma, beta)
    assert out.shape == (batch * seq, dim)
    assert jnp.allclose(out.astype(jnp.float32), ref, atol=3e-2, rtol=3e-2), \
        "mismatch vs reference"

    out = out.reshape(batch, seq, dim)  # restore (B, S, D) view like PyTorch
    jax.block_until_ready(out)
    print("KERNEL_OK")
</pallas_src>

<mosaic_0001>
module attributes {stable_mosaic.version = 11 : i64} {
  func.func @_residual_kernel(%arg0: i32, %arg1: memref<256x128xbf16, #tpu.memory_space<vmem>>, %arg2: memref<128x128xbf16, #tpu.memory_space<vmem>>, %arg3: memref<3x128xf32, #tpu.memory_space<vmem>>, %arg4: memref<256x128xbf16, #tpu.memory_space<vmem>>) attributes {dimension_semantics = [#tpu.dimension_semantics<parallel>], iteration_bounds = array<i64: 2>, scalar_prefetch = 0 : i64, scratch_operands = 0 : i64, tpu.core_type = #tpu.core_type<tc>, window_params = [{transform_indices = @transform_0, window_bounds = array<i64: 256, 128>}, {pipeline_mode = #tpu.pipeline_mode<synchronous>, transform_indices = @transform_1, window_bounds = array<i64: 128, 128>}, {pipeline_mode = #tpu.pipeline_mode<synchronous>, transform_indices = @transform_2, window_bounds = array<i64: 3, 128>}, {transform_indices = @transform_3, window_bounds = array<i64: 256, 128>}]} {
    %c0 = arith.constant 0 : index
    %c0_0 = arith.constant 0 : index
    %0 = vector.load %arg1[%c0, %c0_0] : memref<256x128xbf16, #tpu.memory_space<vmem>>, vector<256x128xbf16>
    %c0_1 = arith.constant 0 : index
    %c0_2 = arith.constant 0 : index
    %1 = vector.load %arg2[%c0_1, %c0_2] : memref<128x128xbf16, #tpu.memory_space<vmem>>, vector<128x128xbf16>
    %cst = arith.constant dense<0.000000e+00> : vector<256x128xf32>
    %2 = tpu.matmul %0, %1, %cst {dimension_numbers = #tpu.dot_dimension_numbers<[1], [0], [0], [1], [0, 0, 1, 1], [], []>} : vector<256x128xbf16>, vector<128x128xbf16>, vector<256x128xf32> -> vector<256x128xf32>
    %c0_3 = arith.constant 0 : index
    %c0_4 = arith.constant 0 : index
    %3 = vector.load %arg3[%c0_3, %c0_4] : memref<3x128xf32, #tpu.memory_space<vmem>>, vector<3x128xf32>
    %4 = vector.extract_strided_slice %3 {offsets = [0, 0], sizes = [1, 128], strides = [1, 1]} : vector<3x128xf32> to vector<1x128xf32>
    %5 = vector.shape_cast %4 : vector<1x128xf32> to vector<128xf32>
    %6 = vector.extract_strided_slice %3 {offsets = [1, 0], sizes = [1, 128], strides = [1, 1]} : vector<3x128xf32> to vector<1x128xf32>
    %7 = vector.shape_cast %6 : vector<1x128xf32> to vector<128xf32>
    %8 = vector.extract_strided_slice %3 {offsets = [2, 0], sizes = [1, 128], strides = [1, 1]} : vector<3x128xf32> to vector<1x128xf32>
    %9 = vector.shape_cast %8 : vector<1x128xf32> to vector<128xf32>
    %10 = vector.shape_cast %5 : vector<128xf32> to vector<1x128xf32>
    %11 = vector.broadcast %10 : vector<1x128xf32> to vector<256x128xf32>
    %12 = arith.addf %2, %11 : vector<256x128xf32>
    %13 = arith.extf %0 : vector<256x128xbf16> to vector<256x128xf32>
    %14 = arith.addf %13, %12 : vector<256x128xf32>
    %cst_5 = arith.constant dense<0.000000e+00> : vector<256xf32>
    %15 = vector.multi_reduction <add>, %14, %cst_5 [1] : vector<256x128xf32> to vector<256xf32>
    %16 = vector.shape_cast %15 : vector<256xf32> to vector<256x1xf32>
    %cst_6 = arith.constant 7.812500e-03 : f32
    %17 = vector.broadcast %cst_6 : f32 to vector<256x1xf32>
    %18 = arith.mulf %16, %17 : vector<256x1xf32>
    %19 = vector.broadcast %18 : vector<256x1xf32> to vector<256x128xf32>
    %20 = arith.subf %14, %19 : vector<256x128xf32>
    %21 = arith.mulf %20, %20 : vector<256x128xf32>
    %cst_7 = arith.constant dense<0.000000e+00> : vector<256xf32>
    %22 = vector.multi_reduction <add>, %21, %cst_7 [1] : vector<256x128xf32> to vector<256xf32>
    %23 = vector.shape_cast %22 : vector<256xf32> to vector<256x1xf32>
    %cst_8 = arith.constant 7.812500e-03 : f32
    %24 = vector.broadcast %cst_8 : f32 to vector<256x1xf32>
    %25 = arith.mulf %23, %24 : vector<256x1xf32>
    %cst_9 = arith.constant 9.99999974E-6 : f32
    %26 = vector.broadcast %cst_9 : f32 to vector<256x1xf32>
    %27 = arith.addf %25, %26 : vector<256x1xf32>
    %28 = math.rsqrt %27 : vector<256x1xf32>
    %29 = vector.broadcast %28 : vector<256x1xf32> to vector<256x128xf32>
    %30 = arith.mulf %20, %29 : vector<256x128xf32>
    %31 = vector.shape_cast %7 : vector<128xf32> to vector<1x128xf32>
    %32 = vector.broadcast %31 : vector<1x128xf32> to vector<256x128xf32>
    %33 = arith.mulf %30, %32 : vector<256x128xf32>
    %34 = vector.shape_cast %9 : vector<128xf32> to vector<1x128xf32>
    %35 = vector.broadcast %34 : vector<1x128xf32> to vector<256x128xf32>
    %36 = arith.addf %33, %35 : vector<256x128xf32>
    %37 = arith.truncf %36 : vector<256x128xf32> to vector<256x128xbf16>
    %c0_10 = arith.constant 0 : index
    %c0_11 = arith.constant 0 : index
    %38 = vector.load %arg4[%c0_10, %c0_11] : memref<256x128xbf16, #tpu.memory_space<vmem>>, vector<256x128xbf16>
    tpu.vector_store %arg4[%c0_10, %c0_11], %37 {strides = array<i32>} : memref<256x128xbf16, #tpu.memory_space<vmem>>, vector<256x128xbf16>,
    return
  }
  func.func @transform_0(%arg0: i32) -> (i32, i32) {
    %c0_i32 = arith.constant 0 : i32
    %c0_i32_0 = arith.constant 0 : i32
    return %arg0, %c0_i32 : i32, i32
  }
  func.func @transform_1(%arg0: i32) -> (i32, i32) {
    %c0_i32 = arith.constant 0 : i32
    %c0_i32_0 = arith.constant 0 : i32
    %c0_i32_1 = arith.constant 0 : i32
    return %c0_i32, %c0_i32_0 : i32, i32
  }
  func.func @transform_2(%arg0: i32) -> (i32, i32) {
    %c0_i32 = arith.constant 0 : i32
    %c0_i32_0 = arith.constant 0 : i32
    %c0_i32_1 = arith.constant 0 : i32
    return %c0_i32, %c0_i32_0 : i32, i32
  }
  func.func @transform_3(%arg0: i32) -> (i32, i32) {
    %c0_i32 = arith.constant 0 : i32
    %c0_i32_0 = arith.constant 0 : i32
    return %arg0, %c0_i32 : i32, i32
  }
}

</mosaic_0001>

<llo_original>
// kernel: _residual_call.1
$region0: #{_residual_call.1}
  #allocation0 [shape = 'u32[]', space=smem, size = 0x4, offset = 0x4, fixed_abs, tag = 'smem constant byte address 0x4 - core index']
  #allocation1 [shape = 'u32[144,128]{1,0:T(1,128)}', space=vmem, size = 0x12000, scoped, tag = 'internal scratch']
  %s0 = inlined_call_operand.hbm [shape: bf16[512,128], index: 0, kind: input, shape index: {}]
  %s1 = inlined_call_operand.hbm [shape: bf16[128,128], index: 1, kind: input, shape index: {}]
  %s2 = inlined_call_operand.vmem [shape: f32[3,128], index: 2, kind: input, shape index: {}]
  %s3 = inlined_call_operand.hbm [shape: bf16[512,128], index: 3, kind: output, shape index: {}]
  %s4 = sld [smem:[#allocation0]]
  $region53: #{_residual_call.1} parent=0
    _
  %s6 = ssub.s32 1, %s4
  %s7 = scalar_select 0, %s6, %s4
  $region1: #{_residual_call.1} parent=0
    #allocation2 [shape = 'u8[131072]{0}', space=vmem, size = 0x20000, scoped, tag = 'input window, operand 0']
    #allocation3 [shape = 's32[2]{0}', space=sflag, size = 0x8, scoped, tag = 'scoped memory for _residual_call.1']
    #allocation4 [shape = 's32[2]{0}', space=sflag, size = 0x8, scoped, tag = 'scoped memory for _residual_call.1']
    #allocation5 [shape = 'u8[32768]{0}', space=vmem, size = 0x8000, scoped, tag = 'input window, operand 1, single buffered']
    #allocation6 [shape = 's32[1]{0}', space=sflag, size = 0x4, scoped, tag = 'scoped memory for _residual_call.1']
    #allocation7 [shape = 'u8[131072]{0}', space=vmem, size = 0x20000, scoped, tag = 'output window, operand 0']
    %8 = vsyncpa [#allocation3], 0
    %s9 = scalar_lea.sflag [#allocation3], 1
    %10 = vsyncpa %s9, 0
    %11 = vsyncpa [#allocation6], 0
    %12 = vsyncpa [#allocation4], 0
    %s13 = scalar_lea.sflag [#allocation4], 1
    %14 = vsyncpa %s13, 0
    loop: start=0, step=1, limit=4
    $region2: #{_residual_call.1} parent=1 // loop_pre_header
      _
    $region3: #{_residual_call.1} parent=1 // loop_header
      %s16 = sphi 0, %s20
      %p17 = scmp.ge.s32.totalorder %s16, 4
      %s26 = sphi 0, %s28
      %s29 = sphi 0, %s26
      %s30 = sphi 0, %s29
      %s46 = sphi 0, %s30
      %s50 = sphi 0, %s50
      %s52 = sphi 0, %s50
      %s53 = sphi 0, %s52
      %s67 = sphi 0, %s53
      %s71 = sphi 0, %s71
      %s73 = sphi 0, %s71
      %s74 = sphi 0, %s73
      %s88 = sphi 0, %s74
      %s94 = sphi 0, %s96
      %s97 = sphi 0, %s94
      %s98 = sphi 0, %s97
      %s114 = sphi 0, %s98
    $region4: #{_residual_call.1} parent=1 // loop_header_branch
      %19 = sbr.rel (%p17) target = $region8
    $region5: #{_residual_call.1} parent=1 // loop_body
      %s21 = ssub.s32 %s16, 1
      %s22 = ssub.s32 %s16, 2
      %s23 = sadd.s32 %s16, 1
      %s24 = ssub.s32 %s16, %s23
      %p25 = scmp.eq.s32.totalorder %s24, 0
      %s27 = sadd.s32 %s26, 1
      %s28 = scalar_select %p25, %s26, %s27
      %p31 = pneg %p25
      %p32 = scmp.eq.s32.totalorder %s16, 1
      %p33 = por %p31, %p32
      %p34 = scmp.ne.s32.totalorder %s26, %s29
      %p35 = scmp.eq.s32.totalorder %s16, 0
      %p36 = por %p34, %p35
      %p37 = scmp.ne.s32.totalorder %s26, %s29
      %p38 = scmp.eq.s32.totalorder %s21, 1
      %p39 = por %p37, %p38
      %p40 = scmp.ne.s32.totalorder %s29, %s30
      %p41 = scmp.eq.s32.totalorder %s21, 0
      %p42 = por %p40, %p41
      %p43 = scmp.ne.s32.totalorder %s29, %s30
      %p44 = scmp.eq.s32.totalorder %s22, 1
      %p45 = por %p43, %p44
      %p47 = scmp.ne.s32.totalorder %s30, %s46
      %p48 = scmp.eq.s32.totalorder %s22, 0
      %p49 = por %p47, %p48
      %s51 = sadd.s32 %s50, 1
      %p54 = scmp.eq.s32.totalorder %s16, 1
      %p55 = scmp.ne.s32.totalorder %s50, %s52
      %p56 = scmp.eq.s32.totalorder %s16, 0
      %p57 = por %p55, %p56
      %p58 = scmp.ne.s32.totalorder %s50, %s52
      %p59 = scmp.eq.s32.totalorder %s21, 1
      %p60 = por %p58, %p59
      %p61 = scmp.ne.s32.totalorder %s52, %s53
      %p62 = scmp.eq.s32.totalorder %s21, 0
      %p63 = por %p61, %p62
      %p64 = scmp.ne.s32.totalorder %s52, %s53
      %p65 = scmp.eq.s32.totalorder %s22, 1
      %p66 = por %p64, %p65
      %p68 = scmp.ne.s32.totalorder %s53, %s67
      %p69 = scmp.eq.s32.totalorder %s22, 0
      %p70 = por %p68, %p69
      %s72 = sadd.s32 %s71, 1
      %p75 = scmp.eq.s32.totalorder %s16, 1
      %p76 = scmp.ne.s32.totalorder %s71, %s73
      %p77 = scmp.eq.s32.totalorder %s16, 0
      %p78 = por %p76, %p77
      %p79 = scmp.ne.s32.totalorder %s71, %s73
      %p80 = scmp.eq.s32.totalorder %s21, 1
      %p81 = por %p79, %p80
      %p82 = scmp.ne.s32.totalorder %s73, %s74
      %p83 = scmp.eq.s32.totalorder %s21, 0
      %p84 = por %p82, %p83
      %p85 = scmp.ne.s32.totalorder %s73, %s74
      %p86 = scmp.eq.s32.totalorder %s22, 1
      %p87 = por %p85, %p86
      %p89 = scmp.ne.s32.totalorder %s74, %s88
      %p90 = scmp.eq.s32.totalorder %s22, 0
      %p91 = por %p89, %p90
      %s92 = ssub.s32 %s16, %s23
      %p93 = scmp.eq.s32.totalorder %s92, 0
      %s95 = sadd.s32 %s94, 1
      %s96 = scalar_select %p93, %s94, %s95
      %p99 = pneg %p93
      %p100 = scmp.eq.s32.totalorder %s16, 1
      %p101 = por %p99, %p100
      %p102 = scmp.ne.s32.totalorder %s94, %s97
      %p103 = scmp.eq.s32.totalorder %s16, 0
      %p104 = por %p102, %p103
      %p105 = scmp.ne.s32.totalorder %s94, %s97
      %p106 = scmp.eq.s32.totalorder %s21, 1
      %p107 = por %p105, %p106
      %p108 = scmp.ne.s32.totalorder %s97, %s98
      %p109 = scmp.eq.s32.totalorder %s21, 0
      %p110 = por %p108, %p109
      %p111 = scmp.ne.s32.totalorder %s97, %s98
      %p112 = scmp.eq.s32.totalorder %s22, 1
      %p113 = por %p111, %p112
      %p115 = scmp.ne.s32.totalorder %s98, %s114
      %p116 = scmp.eq.s32.totalorder %s22, 0
      %p117 = por %p115, %p116
      %p118 = scmp.le.s32.totalorder 1, %s16
      %p119 = scmp.lt.s32.totalorder %s16, 3
      %p120 = pnand %p118, %p119
      %p121 = pneg %p120
      // Predicated region
      $region9: #{_residual_call.1} parent=5 // pred_check
        _
      $region10: #{_residual_call.1} parent=5 // pred_check_branch
        %123 = sbr.rel (%p120) target = $region12
      $region11: #{_residual_call.1} parent=5 // pred_region
        %s124 = ssub.s32 %s16, 1
        // Predicated region
        $region13: #{_residual_call.1} parent=11 // pred_check
          %p125 = pneg %p63
        $region14: #{_residual_call.1} parent=11 // pred_check_branch
          %127 = sbr.rel (%p125) target = $region16
        $region15: #{_residual_call.1} parent=11 // pred_region
          %s129 = ssub.s32 1024, 1024
          %130 = vsyncadd [#allocation6], %s129
          %s131 = sshll.u32 [#allocation5], 4
          %s132 = int_to_ptr.vmem [resolvable:$true] %s131
          %137 = dma.hbm_to_vmem [thread:$0]  %s1, 1024, %s132, [#allocation6], 64, 64, 4
        $region16: #{_residual_call.1} parent=11 // pred_fallthru
          _
        // Predicated region
        $region17: #{_residual_call.1} parent=11 // pred_check
          %p138 = pneg %p84
        $region18: #{_residual_call.1} parent=11 // pred_check_branch
          %140 = sbr.rel (%p138) target = $region20
        $region19: #{_residual_call.1} parent=11 // pred_region
          _
        $region20: #{_residual_call.1} parent=11 // pred_fallthru
          _
      $region12: #{_residual_call.1} parent=5 // pred_fallthru
        _
      %p141 = scmp.lt.s32.totalorder %s16, 2
      // Predicated region
      $region21: #{_residual_call.1} parent=5 // pred_check
        %p142 = pneg %p141
      $region22: #{_residual_call.1} parent=5 // pred_check_branch
        %144 = sbr.rel (%p142) target = $region24
      $region23: #{_residual_call.1} parent=5 // pred_region
        // Predicated region
        $region25: #{_residual_call.1} parent=23 // pred_check
          %p145 = pneg %p36
        $region26: #{_residual_call.1} parent=23 // pred_check_branch
          %147 = sbr.rel (%p145) target = $region28
        $region27: #{_residual_call.1} parent=23 // pred_region
          %s148 = sand.u32 %s26, 1
          %s149 = scalar_lea.sflag [#allocation3], %s148
          %s150 = sand.u32 %s26, 1
          %s151 = smul.addr %s150, 128
          %s152 = scalar_lea.vmem [#allocation2], %s151
          %s153 = smul.u32 32, %s16
          %s155 = ssub.s32 2048, 2048
          %156 = vsyncadd %s149, %s155
          %s157 = smul.addr %s153, 64
          %s158 = scalar_lea.hbm %s0, %s157
          %s159 = sshll.u32 %s152, 4
          %s160 = int_to_ptr.vmem [resolvable:$true] %s159
          %165 = dma.hbm_to_vmem [thread:$0]  %s158, 2048, %s160, %s149, 64, 64, 4
        $region28: #{_residual_call.1} parent=23 // pred_fallthru
          _
      $region24: #{_residual_call.1} parent=5 // pred_fallthru
        _
      %p166 = scmp.le.s32.totalorder 1, %s16
      %p167 = scmp.lt.s32.totalorder %s16, 3
      %p168 = pnand %p166, %p167
      %p169 = pneg %p168
      // Predicated region
      $region29: #{_residual_call.1} parent=5 // pred_check
        _
      $region30: #{_residual_call.1} parent=5 // pred_check_branch
        %171 = sbr.rel (%p168) target = $region32
      $region31: #{_residual_call.1} parent=5 // pred_region
        %s172 = ssub.s32 %s16, 1
        %s173 = sand.u32 %s29, 1
        %s174 = scalar_lea.sflag [#allocation3], %s173
        %s175 = sand.u32 %s29, 1
        %s176 = smul.addr %s175, 128
        %s177 = scalar_lea.vmem [#allocation2], %s176
        // Predicated region
        $region33: #{_residual_call.1} parent=31 // pred_check
          %p178 = pneg %p42
        $region34: #{_residual_call.1} parent=31 // pred_check_branch
          %180 = sbr.rel (%p178) target = $region36
        $region35: #{_residual_call.1} parent=31 // pred_region
          %181 = dma.done %s174, 2048
        $region36: #{_residual_call.1} parent=31 // pred_fallthru
          _
        // Predicated region
        $region37: #{_residual_call.1} parent=31 // pred_check
          %p182 = pneg %p63
        $region38: #{_residual_call.1} parent=31 // pred_check_branch
          %184 = sbr.rel (%p182) target = $region40
        $region39: #{_residual_call.1} parent=31 // pred_region
          %185 = dma.done [#allocation6], 1024
        $region40: #{_residual_call.1} parent=31 // pred_fallthru
          _
        %s186 = sand.u32 %s29, 1
        %s187 = scalar_lea.sflag [#allocation3], %s186
        %s188 = sand.u32 %s29, 1
        %s189 = smul.addr %s188, 128
        %s190 = scalar_lea.vmem [#allocation2], %s189
        %p191 = pneg %p42
        %p192 = pneg %p39
        %p193 = pneg %p63
        %p194 = pneg %p60
        %p195 = pneg %p84
        %p196 = pneg %p81
        %p197 = pneg %p110
        %p198 = pneg %p107
        %s199 = sand.u32 %s97, 1
        %s200 = scalar_lea.sflag [#allocation4], %s199
        %s201 = sand.u32 %s97, 1
        %s202 = smul.addr %s201, 128
        %s203 = scalar_lea.vmem [#allocation7], %s202
        %s204 = smul.u32 32, %s21
        %s205 = smul.u32 32, %s21
        %v207 = vld [vmem:[%s177] sm:$0xf]
        %v208 = vld [vmem:[%s177 + $0x4] sm:$0xf]
        %v209 = vld [vmem:[%s177 + $0x8] sm:$0xf]
        %v210 = vld [vmem:[%s177 + $0xc] sm:$0xf]
        %v211 = vld [vmem:[%s177 + $0x10] sm:$0xf]
        %v212 = vld [vmem:[%s177 + $0x14] sm:$0xf]
        %v213 = vld [vmem:[%s177 + $0x18] sm:$0xf]
        %v214 = vld [vmem:[%s177 + $0x1c] sm:$0xf]
        %v215 = vld [vmem:[%s177 + $0x20] sm:$0xf]
        %v216 = vld [vmem:[%s177 + $0x24] sm:$0xf]
        %v217 = vld [vmem:[%s177 + $0x28] sm:$0xf]
        %v218 = vld [vmem:[%s177 + $0x2c] sm:$0xf]
        %v219 = vld [vmem:[%s177 + $0x30] sm:$0xf]
        %v220 = vld [vmem:[%s177 + $0x34] sm:$0xf]
        %v221 = vld [vmem:[%s177 + $0x38] sm:$0xf]
        %v222 = vld [vmem:[%s177 + $0x3c] sm:$0xf]
        %v223 = vld [vmem:[%s177 + $0x40] sm:$0xf]
        %v224 = vld [vmem:[%s177 + $0x44] sm:$0xf]
        %v225 = vld [vmem:[%s177 + $0x48] sm:$0xf]
        %v226 = vld [vmem:[%s177 + $0x4c] sm:$0xf]
        %v227 = vld [vmem:[%s177 + $0x50] sm:$0xf]
        %v228 = vld [vmem:[%s177 + $0x54] sm:$0xf]
        %v229 = vld [vmem:[%s177 + $0x58] sm:$0xf]
        %v230 = vld [vmem:[%s177 + $0x5c] sm:$0xf]
        %v231 = vld [vmem:[%s177 + $0x60] sm:$0xf]
        %v232 = vld [vmem:[%s177 + $0x64] sm:$0xf]
        %v233 = vld [vmem:[%s177 + $0x68] sm:$0xf]
        %v234 = vld [vmem:[%s177 + $0x6c] sm:$0xf]
        %v235 = vld [vmem:[%s177 + $0x70] sm:$0xf]
        %v236 = vld [vmem:[%s177 + $0x74] sm:$0xf]
        %v237 = vld [vmem:[%s177 + $0x78] sm:$0xf]
        %v238 = vld [vmem:[%s177 + $0x7c] sm:$0xf]
        %v239 = vld [vmem:[#allocation5] sm:$0xf]
        %v240 = vld [vmem:[#allocation5 + $0x4] sm:$0xf]
        %v241 = vld [vmem:[#allocation5 + $0x8] sm:$0xf]
        %v242 = vld [vmem:[#allocation5 + $0xc] sm:$0xf]
        %v243 = vld [vmem:[#allocation5 + $0x10] sm:$0xf]
        %v244 = vld [vmem:[#allocation5 + $0x14] sm:$0xf]
        %v245 = vld [vmem:[#allocation5 + $0x18] sm:$0xf]
        %v246 = vld [vmem:[#allocation5 + $0x1c] sm:$0xf]
        %v247 = vld [vmem:[#allocation5 + $0x20] sm:$0xf]
        %v248 = vld [vmem:[#allocation5 + $0x24] sm:$0xf]
        %v249 = vld [vmem:[#allocation5 + $0x28] sm:$0xf]
        %v250 = vld [vmem:[#allocation5 + $0x2c] sm:$0xf]
        %v251 = vld [vmem:[#allocation5 + $0x30] sm:$0xf]
        %v252 = vld [vmem:[#allocation5 + $0x34] sm:$0xf]
        %v253 = vld [vmem:[#allocation5 + $0x38] sm:$0xf]
        %v254 = vld [vmem:[#allocation5 + $0x3c] sm:$0xf]
        %v255 = vld [vmem:[%s2] sm:$0x7]
        %v256 = vlaneseq
        %v257 = vshrl.u32 %v256, 7
        %v258 = vsub.s32 0, %v257
        %v259 = vrot.slane %v255, %v258
        %v292 = vunpack.c.l.b16 %v207
        %v293 = vunpack.c.l.b16 %v208
        %v294 = vunpack.c.l.b16 %v209
        %v295 = vunpack.c.l.b16 %v210
        %v296 = vunpack.c.l.b16 %v211
        %v297 = vunpack.c.l.b16 %v212
        %v298 = vunpack.c.l.b16 %v213
        %v299 = vunpack.c.l.b16 %v214
        %v300 = vunpack.c.l.b16 %v215
        %v301 = vunpack.c.l.b16 %v216
        %v302 = vunpack.c.l.b16 %v217
        %v303 = vunpack.c.l.b16 %v218
        %v304 = vunpack.c.l.b16 %v219
        %v305 = vunpack.c.l.b16 %v220
        %v306 = vunpack.c.l.b16 %v221
        %v307 = vunpack.c.l.b16 %v222
        %v308 = vunpack.c.l.b16 %v223
        %v309 = vunpack.c.l.b16 %v224
        %v310 = vunpack.c.l.b16 %v225
        %v311 = vunpack.c.l.b16 %v226
        %v312 = vunpack.c.l.b16 %v227
        %v313 = vunpack.c.l.b16 %v228
        %v314 = vunpack.c.l.b16 %v229
        %v315 = vunpack.c.l.b16 %v230
        %v316 = vunpack.c.l.b16 %v231
        %v317 = vunpack.c.l.b16 %v232
        %v318 = vunpack.c.l.b16 %v233
        %v319 = vunpack.c.l.b16 %v234
        %v320 = vunpack.c.l.b16 %v235
        %v321 = vunpack.c.l.b16 %v236
        %v322 = vunpack.c.l.b16 %v237
        %v323 = vunpack.c.l.b16 %v238
        %v324 = vpack.c.b16 %v293, %v292
        %v325 = vpack.c.b16 %v295, %v294
        %v326 = vpack.c.b16 %v297, %v296
        %v327 = vpack.c.b16 %v299, %v298
        %v328 = vpack.c.b16 %v301, %v300
        %v329 = vpack.c.b16 %v303, %v302
        %v330 = vpack.c.b16 %v305, %v304
        %v331 = vpack.c.b16 %v307, %v306
        %v332 = vpack.c.b16 %v309, %v308
        %v333 = vpack.c.b16 %v311, %v310
        %v334 = vpack.c.b16 %v313, %v312
        %v335 = vpack.c.b16 %v315, %v314
        %v336 = vpack.c.b16 %v317, %v316
        %v337 = vpack.c.b16 %v319, %v318
        %v338 = vpack.c.b16 %v321, %v320
        %v339 = vpack.c.b16 %v323, %v322
        %v372 = vunpack.c.l.b16 %v239
        %v373 = vunpack.c.l.b16 %v240
        %v374 = vunpack.c.l.b16 %v241
        %v375 = vunpack.c.l.b16 %v242
        %v376 = vunpack.c.l.b16 %v243
        %v377 = vunpack.c.l.b16 %v244
        %v378 = vunpack.c.l.b16 %v245
        %v379 = vunpack.c.l.b16 %v246
        %v380 = vunpack.c.l.b16 %v247
        %v381 = vunpack.c.l.b16 %v248
        %v382 = vunpack.c.l.b16 %v249
        %v383 = vunpack.c.l.b16 %v250
        %v384 = vunpack.c.l.b16 %v251
        %v385 = vunpack.c.l.b16 %v252
        %v386 = vunpack.c.l.b16 %v253
        %v387 = vunpack.c.l.b16 %v254
        %v388 = vpack.c.b16 %v373, %v372
        %v389 = vpack.c.b16 %v375, %v374
        %v390 = vpack.c.b16 %v377, %v376
        %v391 = vpack.c.b16 %v379, %v378
        %v392 = vpack.c.b16 %v381, %v380
        %v393 = vpack.c.b16 %v383, %v382
        %v394 = vpack.c.b16 %v385, %v384
        %v395 = vpack.c.b16 %v387, %v386
        %404 = vmatprep.subr.bf16.mxu0 0
        %405 = vmatpush1.bf16.msra.mxu0 %v388
        %406 = vmatprep.subr.bf16.mxu0 0
        %407 = vmatpush1.bf16.msra.mxu0 %v389
        %408 = vmatprep.subr.bf16.mxu0 0
        %409 = vmatpush1.bf16.msra.mxu0 %v390
        %410 = vmatprep.subr.bf16.mxu0 0
        %411 = vmatpush1.bf16.msra.mxu0 %v391
        %412 = vmatprep.subr.bf16.mxu0 0
        %413 = vmatpush1.bf16.msra.mxu0 %v392
        %414 = vmatprep.subr.bf16.mxu0 0
        %415 = vmatpush1.bf16.msra.mxu0 %v393
        %416 = vmatprep.subr.bf16.mxu0 0
        %417 = vmatpush1.bf16.msra.mxu0 %v394
        %418 = vmatprep.subr.bf16.mxu0 0
        %419 = vmatpush1.bf16.msra.mxu0 %v395
        %420 = vmatprep.subr.bf16.mxu0 0
        %421 = vmatpush1.bf16.msra.mxu0 0
        %422 = vmatprep.subr.bf16.mxu0 0
        %423 = vmatpush1.bf16.msra.mxu0 0
        %424 = vmatprep.subr.bf16.mxu0 0
        %425 = vmatpush1.bf16.msra.mxu0 0
        %426 = vmatprep.subr.bf16.mxu0 0
        %427 = vmatpush1.bf16.msra.mxu0 0
        %428 = vmatprep.subr.bf16.mxu0 0
        %429 = vmatpush1.bf16.msra.mxu0 0
        %430 = vmatprep.subr.bf16.mxu0 0
        %431 = vmatpush1.bf16.msra.mxu0 0
        %432 = vmatprep.subr.bf16.mxu0 0
        %433 = vmatpush1.bf16.msra.mxu0 0
        %434 = vmatprep.subr.bf16.mxu0 0
        %435 = vmatpush1.bf16.msra.mxu0 0
        %436 = vmatprep.mubr.bf16.mxu0 0
        %437 = vmatmul.mubr.bf16.gmra.mrb[0].mxu0 %v324
        %v438 = vpop.f32.mrb[0].mxu0
        %v439 = vadd.f32 %v259, %v438
        %v440 = vpop.f32.mrb[0].mxu0
        %v441 = vpop.f32.mrb[0].mxu0
        %v442 = vadd.f32 %v259, %v441
        %v443 = vpop.f32.mrb[0].mxu0
        %444 = vmatprep.mubr.bf16.mxu0 0
        %445 = vmatmul.mubr.bf16.gmra.mrb[0].mxu0 %v325
        %v446 = vpop.f32.mrb[0].mxu0
        %v447 = vadd.f32 %v259, %v446
        %v448 = vpop.f32.mrb[0].mxu0
        %v449 = vpop.f32.mrb[0].mxu0
        %v450 = vadd.f32 %v259, %v449
        %v451 = vpop.f32.mrb[0].mxu0
        %452 = vmatprep.mubr.bf16.mxu0 0
        %453 = vmatmul.mubr.bf16.gmra.mrb[0].mxu0 %v326
        %v454 = vpop.f32.mrb[0].mxu0
        %v455 = vadd.f32 %v259, %v454
        %v456 = vpop.f32.mrb[0].mxu0
        %v457 = vpop.f32.mrb[0].mxu0
        %v458 = vadd.f32 %v259, %v457
        %v459 = vpop.f32.mrb[0].mxu0
        %460 = vmatprep.mubr.bf16.mxu0 0
        %461 = vmatmul.mubr.bf16.gmra.mrb[0].mxu0 %v327
        %v462 = vpop.f32.mrb[0].mxu0
        %v463 = vadd.f32 %v259, %v462
        %v464 = vpop.f32.mrb[0].mxu0
        %v465 = vpop.f32.mrb[0].mxu0
        %v466 = vadd.f32 %v259, %v465
        %v467 = vpop.f32.mrb[0].mxu0
        %468 = vmatprep.mubr.bf16.mxu0 0
        %469 = vmatmul.mubr.bf16.gmra.mrb[0].mxu0 %v328
        %v470 = vpop.f32.mrb[0].mxu0
        %v471 = vadd.f32 %v259, %v470
        %v472 = vpop.f32.mrb[0].mxu0
        %v473 = vpop.f32.mrb[0].mxu0
        %v474 = vadd.f32 %v259, %v473
        %v475 = vpop.f32.mrb[0].mxu0
        %476 = vmatprep.mubr.bf16.mxu0 0
        %477 = vmatmul.mubr.bf16.gmra.mrb[0].mxu0 %v329
        %v478 = vpop.f32.mrb[0].mxu0
        %v479 = vadd.f32 %v259, %v478
        %v480 = vpop.f32.mrb[0].mxu0
        %v481 = vpop.f32.mrb[0].mxu0
        %v482 = vadd.f32 %v259, %v481
        %v483 = vpop.f32.mrb[0].mxu0
        %484 = vmatprep.mubr.bf16.mxu0 0
        %485 = vmatmul.mubr.bf16.gmra.mrb[0].mxu0 %v330
        %v486 = vpop.f32.mrb[0].mxu0
        %v487 = vadd.f32 %v259, %v486
        %v488 = vpop.f32.mrb[0].mxu0
        %v489 = vpop.f32.mrb[0].mxu0
        %v490 = vadd.f32 %v259, %v489
        %v491 = vpop.f32.mrb[0].mxu0
        %492 = vmatprep.mubr.bf16.mxu0 0
        %493 = vmatmul.mubr.bf16.gmra.mrb[0].mxu0 %v331
        %v494 = vpop.f32.mrb[0].mxu0
        %v495 = vadd.f32 %v259, %v494
        %v496 = vpop.f32.mrb[0].mxu0
        %v497 = vpop.f32.mrb[0].mxu0
        %v498 = vadd.f32 %v259, %v497
        %v499 = vpop.f32.mrb[0].mxu0
        %500 = vmatprep.mubr.bf16.mxu0 0
        %501 = vmatmul.mubr.bf16.gmra.mrb[0].mxu0 %v332
        %v502 = vpop.f32.mrb[0].mxu0
        %v503 = vadd.f32 %v259, %v502
        %v504 = vpop.f32.mrb[0].mxu0
        %v505 = vpop.f32.mrb[0].mxu0
        %v506 = vadd.f32 %v259, %v505
        %v507 = vpop.f32.mrb[0].mxu0
        %508 = vmatprep.mubr.bf16.mxu0 0
        %509 = vmatmul.mubr.bf16.gmra.mrb[0].mxu0 %v333
        %v510 = vpop.f32.mrb[0].mxu0
        %v511 = vadd.f32 %v259, %v510
        %v512 = vpop.f32.mrb[0].mxu0
        %v513 = vpop.f32.mrb[0].mxu0
        %v514 = vadd.f32 %v259, %v513
        %v515 = vpop.f32.mrb[0].mxu0
        %516 = vmatprep.mubr.bf16.mxu0 0
        %517 = vmatmul.mubr.bf16.gmra.mrb[0].mxu0 %v334
        %v518 = vpop.f32.mrb[0].mxu0
        %v519 = vadd.f32 %v259, %v518
        %v520 = vpop.f32.mrb[0].mxu0
        %v521 = vpop.f32.mrb[0].mxu0
        %v522 = vadd.f32 %v259, %v521
        %v523 = vpop.f32.mrb[0].mxu0
        %524 = vmatprep.mubr.bf16.mxu0 0
        %525 = vmatmul.mubr.bf16.gmra.mrb[0].mxu0 %v335
        %v526 = vpop.f32.mrb[0].mxu0
        %v527 = vadd.f32 %v259, %v526
        %v528 = vpop.f32.mrb[0].mxu0
        %v529 = vpop.f32.mrb[0].mxu0
        %v530 = vadd.f32 %v259, %v529
        %v531 = vpop.f32.mrb[0].mxu0
        %532 = vmatprep.mubr.bf16.mxu0 0
        %533 = vmatmul.mubr.bf16.gmra.mrb[0].mxu0 %v336
        %v534 = vpop.f32.mrb[0].mxu0
        %v535 = vadd.f32 %v259, %v534
        %v536 = vpop.f32.mrb[0].mxu0
        %v537 = vpop.f32.mrb[0].mxu0
        %v538 = vadd.f32 %v259, %v537
        %v539 = vpop.f32.mrb[0].mxu0
        %540 = vmatprep.mubr.bf16.mxu0 0
        %541 = vmatmul.mubr.bf16.gmra.mrb[0].mxu0 %v337
        %v542 = vpop.f32.mrb[0].mxu0
        %v543 = vadd.f32 %v259, %v542
        %v544 = vpop.f32.mrb[0].mxu0
        %v545 = vpop.f32.mrb[0].mxu0
        %v546 = vadd.f32 %v259, %v545
        %v547 = vpop.f32.mrb[0].mxu0
        %548 = vmatprep.mubr.bf16.mxu0 0
        %549 = vmatmul.mubr.bf16.gmra.mrb[0].mxu0 %v338
        %v550 = vpop.f32.mrb[0].mxu0
        %v551 = vadd.f32 %v259, %v550
        %v552 = vpop.f32.mrb[0].mxu0
        %v553 = vpop.f32.mrb[0].mxu0
        %v554 = vadd.f32 %v259, %v553
        %v555 = vpop.f32.mrb[0].mxu0
        %556 = vmatprep.mubr.bf16.mxu0 0
        %557 = vmatmul.mubr.bf16.gmra.mrb[0].mxu0 %v339
        %v558 = vpop.f32.mrb[0].mxu0
        %v559 = vadd.f32 %v259, %v558
        %v560 = vpop.f32.mrb[0].mxu0
        %v561 = vpop.f32.mrb[0].mxu0
        %v562 = vadd.f32 %v259, %v561
        %v563 = vpop.f32.mrb[0].mxu0
        %564 = vdwg.mxu0
        %v565 = vunpack.c.l.bf16 %v207
        %v566 = vunpack.c.l.bf16 %v208
        %v567 = vunpack.c.l.bf16 %v209
        %v568 = vunpack.c.l.bf16 %v210
        %v569 = vunpack.c.l.bf16 %v211
        %v570 = vunpack.c.l.bf16 %v212
        %v571 = vunpack.c.l.bf16 %v213
        %v572 = vunpack.c.l.bf16 %v214
        %v573 = vunpack.c.l.bf16 %v215
        %v574 = vunpack.c.l.bf16 %v216
        %v575 = vunpack.c.l.bf16 %v217
        %v576 = vunpack.c.l.bf16 %v218
        %v577 = vunpack.c.l.bf16 %v219
        %v578 = vunpack.c.l.bf16 %v220
        %v579 = vunpack.c.l.bf16 %v221
        %v580 = vunpack.c.l.bf16 %v222
        %v581 = vunpack.c.l.bf16 %v223
        %v582 = vunpack.c.l.bf16 %v224
        %v583 = vunpack.c.l.bf16 %v225
        %v584 = vunpack.c.l.bf16 %v226
        %v585 = vunpack.c.l.bf16 %v227
        %v586 = vunpack.c.l.bf16 %v228
        %v587 = vunpack.c.l.bf16 %v229
        %v588 = vunpack.c.l.bf16 %v230
        %v589 = vunpack.c.l.bf16 %v231
        %v590 = vunpack.c.l.bf16 %v232
        %v591 = vunpack.c.l.bf16 %v233
        %v592 = vunpack.c.l.bf16 %v234
        %v593 = vunpack.c.l.bf16 %v235
        %v594 = vunpack.c.l.bf16 %v236
        %v595 = vunpack.c.l.bf16 %v237
        %v596 = vunpack.c.l.bf16 %v238
        %v597 = vadd.f32 %v565, %v439
        %v598 = vadd.f32 %v566, %v442
        %v599 = vadd.f32 %v567, %v447
        %v600 = vadd.f32 %v568, %v450
        %v601 = vadd.f32 %v569, %v455
        %v602 = vadd.f32 %v570, %v458
        %v603 = vadd.f32 %v571, %v463
        %v604 = vadd.f32 %v572, %v466
        %v605 = vadd.f32 %v573, %v471
        %v606 = vadd.f32 %v574, %v474
        %v607 = vadd.f32 %v575, %v479
        %v608 = vadd.f32 %v576, %v482
        %v609 = vadd.f32 %v577, %v487
        %v610 = vadd.f32 %v578, %v490
        %v611 = vadd.f32 %v579, %v495
        %v612 = vadd.f32 %v580, %v498
        %v613 = vadd.f32 %v581, %v503
        %v614 = vadd.f32 %v582, %v506
        %v615 = vadd.f32 %v583, %v511
        %v616 = vadd.f32 %v584, %v514
        %v617 = vadd.f32 %v585, %v519
        %v618 = vadd.f32 %v586, %v522
        %v619 = vadd.f32 %v587, %v527
        %v620 = vadd.f32 %v588, %v530
        %v621 = vadd.f32 %v589, %v535
        %v622 = vadd.f32 %v590, %v538
        %v623 = vadd.f32 %v591, %v543
        %v624 = vadd.f32 %v592, %v546
        %v625 = vadd.f32 %v593, %v551
        %v626 = vadd.f32 %v594, %v554
        %v627 = vadd.f32 %v595, %v559
        %v628 = vadd.f32 %v596, %v562
        %629 = vadd.xlane.f32.xlu0 %v597
        %v630 = vpop.xlane.xlu0 %629
        %631 = vadd.xlane.f32.xlu0 %v598
        %v632 = vpop.xlane.xlu0 %631
        %633 = vadd.xlane.f32.xlu0 %v599
        %v634 = vpop.xlane.xlu0 %633
        %635 = vadd.xlane.f32.xlu0 %v600
        %v636 = vpop.xlane.xlu0 %635
        %637 = vadd.xlane.f32.xlu0 %v601
        %v638 = vpop.xlane.xlu0 %637
        %639 = vadd.xlane.f32.xlu0 %v602
        %v640 = vpop.xlane.xlu0 %639
        %641 = vadd.xlane.f32.xlu0 %v603
        %v642 = vpop.xlane.xlu0 %641
        %643 = vadd.xlane.f32.xlu0 %v604
        %v644 = vpop.xlane.xlu0 %643
        %645 = vadd.xlane.f32.xlu0 %v605
        %v646 = vpop.xlane.xlu0 %645
        %647 = vadd.xlane.f32.xlu0 %v606
        %v648 = vpop.xlane.xlu0 %647
        %649 = vadd.xlane.f32.xlu0 %v607
        %v650 = vpop.xlane.xlu0 %649
        %651 = vadd.xlane.f32.xlu0 %v608
        %v652 = vpop.xlane.xlu0 %651
        %653 = vadd.xlane.f32.xlu0 %v609
        %v654 = vpop.xlane.xlu0 %653
        %655 = vadd.xlane.f32.xlu0 %v610
        %v656 = vpop.xlane.xlu0 %655
        %657 = vadd.xlane.f32.xlu0 %v611
        %v658 = vpop.xlane.xlu0 %657
        %659 = vadd.xlane.f32.xlu0 %v612
        %v660 = vpop.xlane.xlu0 %659
        %661 = vadd.xlane.f32.xlu0 %v613
        %v662 = vpop.xlane.xlu0 %661
        %663 = vadd.xlane.f32.xlu0 %v614
        %v664 = vpop.xlane.xlu0 %663
        %665 = vadd.xlane.f32.xlu0 %v615
        %v666 = vpop.xlane.xlu0 %665
        %667 = vadd.xlane.f32.xlu0 %v616
        %v668 = vpop.xlane.xlu0 %667
        %669 = vadd.xlane.f32.xlu0 %v617
        %v670 = vpop.xlane.xlu0 %669
        %671 = vadd.xlane.f32.xlu0 %v618
        %v672 = vpop.xlane.xlu0 %671
        %673 = vadd.xlane.f32.xlu0 %v619
        %v674 = vpop.xlane.xlu0 %673
        %675 = vadd.xlane.f32.xlu0 %v620
        %v676 = vpop.xlane.xlu0 %675
        %677 = vadd.xlane.f32.xlu0 %v621
        %v678 = vpop.xlane.xlu0 %677
        %679 = vadd.xlane.f32.xlu0 %v622
        %v680 = vpop.xlane.xlu0 %679
        %681 = vadd.xlane.f32.xlu0 %v623
        %v682 = vpop.xlane.xlu0 %681
        %683 = vadd.xlane.f32.xlu0 %v624
        %v684 = vpop.xlane.xlu0 %683
        %685 = vadd.xlane.f32.xlu0 %v625
        %v686 = vpop.xlane.xlu0 %685
        %687 = vadd.xlane.f32.xlu0 %v626
        %v688 = vpop.xlane.xlu0 %687
        %689 = vadd.xlane.f32.xlu0 %v627
        %v690 = vpop.xlane.xlu0 %689
        %691 = vadd.xlane.f32.xlu0 %v628
        %v692 = vpop.xlane.xlu0 %691
        %v693 = vmul.f32 %v630, 0.0078125
        %v694 = vmul.f32 %v632, 0.0078125
        %v695 = vmul.f32 %v634, 0.0078125
        %v696 = vmul.f32 %v636, 0.0078125
        %v697 = vmul.f32 %v638, 0.0078125
        %v698 = vmul.f32 %v640, 0.0078125
        %v699 = vmul.f32 %v642, 0.0078125
        %v700 = vmul.f32 %v644, 0.0078125
        %v701 = vmul.f32 %v646, 0.0078125
        %v702 = vmul.f32 %v648, 0.0078125
        %v703 = vmul.f32 %v650, 0.0078125
        %v704 = vmul.f32 %v652, 0.0078125
        %v705 = vmul.f32 %v654, 0.0078125
        %v706 = vmul.f32 %v656, 0.0078125
        %v707 = vmul.f32 %v658, 0.0078125
        %v708 = vmul.f32 %v660, 0.0078125
        %v709 = vmul.f32 %v662, 0.0078125
        %v710 = vmul.f32 %v664, 0.0078125
        %v711 = vmul.f32 %v666, 0.0078125
        %v712 = vmul.f32 %v668, 0.0078125
        %v713 = vmul.f32 %v670, 0.0078125
        %v714 = vmul.f32 %v672, 0.0078125
        %v715 = vmul.f32 %v674, 0.0078125
        %v716 = vmul.f32 %v676, 0.0078125
        %v717 = vmul.f32 %v678, 0.0078125
        %v718 = vmul.f32 %v680, 0.0078125
        %v719 = vmul.f32 %v682, 0.0078125
        %v720 = vmul.f32 %v684, 0.0078125
        %v721 = vmul.f32 %v686, 0.0078125
        %v722 = vmul.f32 %v688, 0.0078125
        %v723 = vmul.f32 %v690, 0.0078125
        %v724 = vmul.f32 %v692, 0.0078125
        %v725 = vsub.f32 %v597, %v693
        %v726 = vsub.f32 %v598, %v694
        %v727 = vsub.f32 %v599, %v695
        %v728 = vsub.f32 %v600, %v696
        %v729 = vsub.f32 %v601, %v697
        %v730 = vsub.f32 %v602, %v698
        %v731 = vsub.f32 %v603, %v699
        %v732 = vsub.f32 %v604, %v700
        %v733 = vsub.f32 %v605, %v701
        %v734 = vsub.f32 %v606, %v702
        %v735 = vsub.f32 %v607, %v703
        %v736 = vsub.f32 %v608, %v704
        %v737 = vsub.f32 %v609, %v705
        %v738 = vsub.f32 %v610, %v706
        %v739 = vsub.f32 %v611, %v707
        %v740 = vsub.f32 %v612, %v708
        %v741 = vsub.f32 %v613, %v709
        %v742 = vsub.f32 %v614, %v710
        %v743 = vsub.f32 %v615, %v711
        %v744 = vsub.f32 %v616, %v712
        %v745 = vsub.f32 %v617, %v713
        %v746 = vsub.f32 %v618, %v714
        %v747 = vsub.f32 %v619, %v715
        %v748 = vsub.f32 %v620, %v716
        %v749 = vsub.f32 %v621, %v717
        %v750 = vsub.f32 %v622, %v718
        %v751 = vsub.f32 %v623, %v719
        %v752 = vsub.f32 %v624, %v720
        %v753 = vsub.f32 %v625, %v721
        %v754 = vsub.f32 %v626, %v722
        %v755 = vsub.f32 %v627, %v723
        %v756 = vsub.f32 %v628, %v724
        %v757 = vmul.f32 %v725, %v725
        %v758 = vmul.f32 %v726, %v726
        %v759 = vmul.f32 %v727, %v727
        %v760 = vmul.f32 %v728, %v728
        %v761 = vmul.f32 %v729, %v729
        %v762 = vmul.f32 %v730, %v730
        %v763 = vmul.f32 %v731, %v731
        %v764 = vmul.f32 %v732, %v732
        %v765 = vmul.f32 %v733, %v733
        %v766 = vmul.f32 %v734, %v734
        %v767 = vmul.f32 %v735, %v735
        %v768 = vmul.f32 %v736, %v736
        %v769 = vmul.f32 %v737, %v737
        %v770 = vmul.f32 %v738, %v738
        %v771 = vmul.f32 %v739, %v739
        %v772 = vmul.f32 %v740, %v740
        %v773 = vmul.f32 %v741, %v741
        %v774 = vmul.f32 %v742, %v742
        %v775 = vmul.f32 %v743, %v743
        %v776 = vmul.f32 %v744, %v744
        %v777 = vmul.f32 %v745, %v745
        %v778 = vmul.f32 %v746, %v746
        %v779 = vmul.f32 %v747, %v747
        %v780 = vmul.f32 %v748, %v748
        %v781 = vmul.f32 %v749, %v749
        %v782 = vmul.f32 %v750, %v750
        %v783 = vmul.f32 %v751, %v751
        %v784 = vmul.f32 %v752, %v752
        %v785 = vmul.f32 %v753, %v753
        %v786 = vmul.f32 %v754, %v754
        %v787 = vmul.f32 %v755, %v755
        %v788 = vmul.f32 %v756, %v756
        %789 = vadd.xlane.f32.xlu0 %v757
        %v790 = vpop.xlane.xlu0 %789
        %791 = vadd.xlane.f32.xlu0 %v758
        %v792 = vpop.xlane.xlu0 %791
        %793 = vadd.xlane.f32.xlu0 %v759
        %v794 = vpop.xlane.xlu0 %793
        %795 = vadd.xlane.f32.xlu0 %v760
        %v796 = vpop.xlane.xlu0 %795
        %797 = vadd.xlane.f32.xlu0 %v761
        %v798 = vpop.xlane.xlu0 %797
        %799 = vadd.xlane.f32.xlu0 %v762
        %v800 = vpop.xlane.xlu0 %799
        %801 = vadd.xlane.f32.xlu0 %v763
        %v802 = vpop.xlane.xlu0 %801
        %803 = vadd.xlane.f32.xlu0 %v764
        %v804 = vpop.xlane.xlu0 %803
        %805 = vadd.xlane.f32.xlu0 %v765
        %v806 = vpop.xlane.xlu0 %805
        %807 = vadd.xlane.f32.xlu0 %v766
        %v808 = vpop.xlane.xlu0 %807
        %809 = vadd.xlane.f32.xlu0 %v767
        %v810 = vpop.xlane.xlu0 %809
        %811 = vadd.xlane.f32.xlu0 %v768
        %v812 = vpop.xlane.xlu0 %811
        %813 = vadd.xlane.f32.xlu0 %v769
        %v814 = vpop.xlane.xlu0 %813
        %815 = vadd.xlane.f32.xlu0 %v770
        %v816 = vpop.xlane.xlu0 %815
        %817 = vadd.xlane.f32.xlu0 %v771
        %v818 = vpop.xlane.xlu0 %817
        %819 = vadd.xlane.f32.xlu0 %v772
        %v820 = vpop.xlane.xlu0 %819
        %821 = vadd.xlane.f32.xlu0 %v773
        %v822 = vpop.xlane.xlu0 %821
        %823 = vadd.xlane.f32.xlu0 %v774
        %v824 = vpop.xlane.xlu0 %823
        %825 = vadd.xlane.f32.xlu0 %v775
        %v826 = vpop.xlane.xlu0 %825
        %827 = vadd.xlane.f32.xlu0 %v776
        %v828 = vpop.xlane.xlu0 %827
        %829 = vadd.xlane.f32.xlu0 %v777
        %v830 = vpop.xlane.xlu0 %829
        %831 = vadd.xlane.f32.xlu0 %v778
        %v832 = vpop.xlane.xlu0 %831
        %833 = vadd.xlane.f32.xlu0 %v779
        %v834 = vpop.xlane.xlu0 %833
        %835 = vadd.xlane.f32.xlu0 %v780
        %v836 = vpop.xlane.xlu0 %835
        %837 = vadd.xlane.f32.xlu0 %v781
        %v838 = vpop.xlane.xlu0 %837
        %839 = vadd.xlane.f32.xlu0 %v782
        %v840 = vpop.xlane.xlu0 %839
        %841 = vadd.xlane.f32.xlu0 %v783
        %v842 = vpop.xlane.xlu0 %841
        %843 = vadd.xlane.f32.xlu0 %v784
        %v844 = vpop.xlane.xlu0 %843
        %845 = vadd.xlane.f32.xlu0 %v785
        %v846 = vpop.xlane.xlu0 %845
        %847 = vadd.xlane.f32.xlu0 %v786
        %v848 = vpop.xlane.xlu0 %847
        %849 = vadd.xlane.f32.xlu0 %v787
        %v850 = vpop.xlane.xlu0 %849
        %851 = vadd.xlane.f32.xlu0 %v788
        %v852 = vpop.xlane.xlu0 %851
        %v853 = vmul.f32 %v790, 0.0078125
        %v854 = vmul.f32 %v792, 0.0078125
        %v855 = vmul.f32 %v794, 0.0078125
        %v856 = vmul.f32 %v796, 0.0078125
        %v857 = vmul.f32 %v798, 0.0078125
        %v858 = vmul.f32 %v800, 0.0078125
        %v859 = vmul.f32 %v802, 0.0078125
        %v860 = vmul.f32 %v804, 0.0078125
        %v861 = vmul.f32 %v806, 0.0078125
        %v862 = vmul.f32 %v808, 0.0078125
        %v863 = vmul.f32 %v810, 0.0078125
        %v864 = vmul.f32 %v812, 0.0078125
        %v865 = vmul.f32 %v814, 0.0078125
        %v866 = vmul.f32 %v816, 0.0078125
        %v867 = vmul.f32 %v818, 0.0078125
        %v868 = vmul.f32 %v820, 0.0078125
        %v869 = vmul.f32 %v822, 0.0078125
        %v870 = vmul.f32 %v824, 0.0078125
        %v871 = vmul.f32 %v826, 0.0078125
        %v872 = vmul.f32 %v828, 0.0078125
        %v873 = vmul.f32 %v830, 0.0078125
        %v874 = vmul.f32 %v832, 0.0078125
        %v875 = vmul.f32 %v834, 0.0078125
        %v876 = vmul.f32 %v836, 0.0078125
        %v877 = vmul.f32 %v838, 0.0078125
        %v878 = vmul.f32 %v840, 0.0078125
        %v879 = vmul.f32 %v842, 0.0078125
        %v880 = vmul.f32 %v844, 0.0078125
        %v881 = vmul.f32 %v846, 0.0078125
        %v882 = vmul.f32 %v848, 0.0078125
        %v883 = vmul.f32 %v850, 0.0078125
        %v884 = vmul.f32 %v852, 0.0078125
        %v885 = vadd.f32 %v853, 1e-05
        %v886 = vadd.f32 %v854, 1e-05
        %v887 = vadd.f32 %v855, 1e-05
        %v888 = vadd.f32 %v856, 1e-05
        %v889 = vadd.f32 %v857, 1e-05
        %v890 = vadd.f32 %v858, 1e-05
        %v891 = vadd.f32 %v859, 1e-05
        %v892 = vadd.f32 %v860, 1e-05
        %v893 = vadd.f32 %v861, 1e-05
        %v894 = vadd.f32 %v862, 1e-05
        %v895 = vadd.f32 %v863, 1e-05
        %v896 = vadd.f32 %v864, 1e-05
        %v897 = vadd.f32 %v865, 1e-05
        %v898 = vadd.f32 %v866, 1e-05
        %v899 = vadd.f32 %v867, 1e-05
        %v900 = vadd.f32 %v868, 1e-05
        %v901 = vadd.f32 %v869, 1e-05
        %v902 = vadd.f32 %v870, 1e-05
        %v903 = vadd.f32 %v871, 1e-05
        %v904 = vadd.f32 %v872, 1e-05
        %v905 = vadd.f32 %v873, 1e-05
        %v906 = vadd.f32 %v874, 1e-05
        %v907 = vadd.f32 %v875, 1e-05
        %v908 = vadd.f32 %v876, 1e-05
        %v909 = vadd.f32 %v877, 1e-05
        %v910 = vadd.f32 %v878, 1e-05
        %v911 = vadd.f32 %v879, 1e-05
        %v912 = vadd.f32 %v880, 1e-05
        %v913 = vadd.f32 %v881, 1e-05
        %v914 = vadd.f32 %v882, 1e-05
        %v915 = vadd.f32 %v883, 1e-05
        %v916 = vadd.f32 %v884, 1e-05
        %v917 = vrsqrt.pop %v885
        %v918 = vrsqrt.pop %v886
        %v919 = vrsqrt.pop %v887
        %v920 = vrsqrt.pop %v888
        %v921 = vrsqrt.pop %v889
        %v922 = vrsqrt.pop %v890
        %v923 = vrsqrt.pop %v891
        %v924 = vrsqrt.pop %v892
        %v925 = vrsqrt.pop %v893
        %v926 = vrsqrt.pop %v894
        %v927 = vrsqrt.pop %v895
        %v928 = vrsqrt.pop %v896
        %v929 = vrsqrt.pop %v897
        %v930 = vrsqrt.pop %v898
        %v931 = vrsqrt.pop %v899
        %v932 = vrsqrt.pop %v900
        %v933 = vrsqrt.pop %v901
        %v934 = vrsqrt.pop %v902
        %v935 = vrsqrt.pop %v903
        %v936 = vrsqrt.pop %v904
        %v937 = vrsqrt.pop %v905
        %v938 = vrsqrt.pop %v906
        %v939 = vrsqrt.pop %v907
        %v940 = vrsqrt.pop %v908
        %v941 = vrsqrt.pop %v909
        %v942 = vrsqrt.pop %v910
        %v943 = vrsqrt.pop %v911
        %v944 = vrsqrt.pop %v912
        %v945 = vrsqrt.pop %v913
        %v946 = vrsqrt.pop %v914
        %v947 = vrsqrt.pop %v915
        %v948 = vrsqrt.pop %v916
        %v949 = vmul.f32 %v725, %v917
        %v950 = vmul.f32 %v726, %v918
        %v951 = vmul.f32 %v727, %v919
        %v952 = vmul.f32 %v728, %v920
        %v953 = vmul.f32 %v729, %v921
        %v954 = vmul.f32 %v730, %v922
        %v955 = vmul.f32 %v731, %v923
        %v956 = vmul.f32 %v732, %v924
        %v957 = vmul.f32 %v733, %v925
        %v958 = vmul.f32 %v734, %v926
        %v959 = vmul.f32 %v735, %v927
        %v960 = vmul.f32 %v736, %v928
        %v961 = vmul.f32 %v737, %v929
        %v962 = vmul.f32 %v738, %v930
        %v963 = vmul.f32 %v739, %v931
        %v964 = vmul.f32 %v740, %v932
        %v965 = vmul.f32 %v741, %v933
        %v966 = vmul.f32 %v742, %v934
        %v967 = vmul.f32 %v743, %v935
        %v968 = vmul.f32 %v744, %v936
        %v969 = vmul.f32 %v745, %v937
        %v970 = vmul.f32 %v746, %v938
        %v971 = vmul.f32 %v747, %v939
        %v972 = vmul.f32 %v748, %v940
        %v973 = vmul.f32 %v749, %v941
        %v974 = vmul.f32 %v750, %v942
        %v975 = vmul.f32 %v751, %v943
        %v976 = vmul.f32 %v752, %v944
        %v977 = vmul.f32 %v753, %v945
        %v978 = vmul.f32 %v754, %v946
        %v979 = vmul.f32 %v755, %v947
        %v980 = vmul.f32 %v756, %v948
        %v981 = vlaneseq
        %v982 = vshrl.u32 %v981, 7
        %v983 = vsub.s32 1, %v982
        %v984 = vrot.slane %v255, %v983
        %v985 = vmul.f32 %v949, %v984
        %v986 = vmul.f32 %v950, %v984
        %v987 = vmul.f32 %v951, %v984
        %v988 = vmul.f32 %v952, %v984
        %v989 = vmul.f32 %v953, %v984
        %v990 = vmul.f32 %v954, %v984
        %v991 = vmul.f32 %v955, %v984
        %v992 = vmul.f32 %v956, %v984
        %v993 = vmul.f32 %v957, %v984
        %v994 = vmul.f32 %v958, %v984
        %v995 = vmul.f32 %v959, %v984
        %v996 = vmul.f32 %v960, %v984
        %v997 = vmul.f32 %v961, %v984
        %v998 = vmul.f32 %v962, %v984
        %v999 = vmul.f32 %v963, %v984
        %v1000 = vmul.f32 %v964, %v984
        %v1001 = vmul.f32 %v965, %v984
        %v1002 = vmul.f32 %v966, %v984
        %v1003 = vmul.f32 %v967, %v984
        %v1004 = vmul.f32 %v968, %v984
        %v1005 = vmul.f32 %v969, %v984
        %v1006 = vmul.f32 %v970, %v984
        %v1007 = vmul.f32 %v971, %v984
        %v1008 = vmul.f32 %v972, %v984
        %v1009 = vmul.f32 %v973, %v984
        %v1010 = vmul.f32 %v974, %v984
        %v1011 = vmul.f32 %v975, %v984
        %v1012 = vmul.f32 %v976, %v984
        %v1013 = vmul.f32 %v977, %v984
        %v1014 = vmul.f32 %v978, %v984
        %v1015 = vmul.f32 %v979, %v984
        %v1016 = vmul.f32 %v980, %v984
        %v1017 = vlaneseq
        %v1018 = vshrl.u32 %v1017, 7
        %v1019 = vsub.s32 2, %v1018
        %v1020 = vrot.slane %v255, %v1019
        %v1021 = vadd.f32 %v985, %v1020
        %v1022 = vadd.f32 %v986, %v1020
        %v1023 = vadd.f32 %v987, %v1020
        %v1024 = vadd.f32 %v988, %v1020
        %v1025 = vadd.f32 %v989, %v1020
        %v1026 = vadd.f32 %v990, %v1020
        %v1027 = vadd.f32 %v991, %v1020
        %v1028 = vadd.f32 %v992, %v1020
        %v1029 = vadd.f32 %v993, %v1020
        %v1030 = vadd.f32 %v994, %v1020
        %v1031 = vadd.f32 %v995, %v1020
        %v1032 = vadd.f32 %v996, %v1020
        %v1033 = vadd.f32 %v997, %v1020
        %v1034 = vadd.f32 %v998, %v1020
        %v1035 = vadd.f32 %v999, %v1020
        %v1036 = vadd.f32 %v1000, %v1020
        %v1037 = vadd.f32 %v1001, %v1020
        %v1038 = vadd.f32 %v1002, %v1020
        %v1039 = vadd.f32 %v1003, %v1020
        %v1040 = vadd.f32 %v1004, %v1020
        %v1041 = vadd.f32 %v1005, %v1020
        %v1042 = vadd.f32 %v1006, %v1020
        %v1043 = vadd.f32 %v1007, %v1020
        %v1044 = vadd.f32 %v1008, %v1020
        %v1045 = vadd.f32 %v1009, %v1020
        %v1046 = vadd.f32 %v1010, %v1020
        %v1047 = vadd.f32 %v1011, %v1020
        %v1048 = vadd.f32 %v1012, %v1020
        %v1049 = vadd.f32 %v1013, %v1020
        %v1050 = vadd.f32 %v1014, %v1020
        %v1051 = vadd.f32 %v1015, %v1020
        %v1052 = vadd.f32 %v1016, %v1020
        %v1053 = vpack.c.bf16 %v1022, %v1021
        %v1054 = vpack.c.bf16 %v1024, %v1023
        %v1055 = vpack.c.bf16 %v1026, %v1025
        %v1056 = vpack.c.bf16 %v1028, %v1027
        %v1057 = vpack.c.bf16 %v1030, %v1029
        %v1058 = vpack.c.bf16 %v1032, %v1031
        %v1059 = vpack.c.bf16 %v1034, %v1033
        %v1060 = vpack.c.bf16 %v1036, %v1035
        %v1061 = vpack.c.bf16 %v1038, %v1037
        %v1062 = vpack.c.bf16 %v1040, %v1039
        %v1063 = vpack.c.bf16 %v1042, %v1041
        %v1064 = vpack.c.bf16 %v1044, %v1043
        %v1065 = vpack.c.bf16 %v1046, %v1045
        %v1066 = vpack.c.bf16 %v1048, %v1047
        %v1067 = vpack.c.bf16 %v1050, %v1049
        %v1068 = vpack.c.bf16 %v1052, %v1051
        %v1085 = vunpack.c.l.b16 %v1053
        %v1086 = vunpack.c.h.b16 %v1053
        %v1087 = vunpack.c.l.b16 %v1054
        %v1088 = vunpack.c.h.b16 %v1054
        %v1089 = vunpack.c.l.b16 %v1055
        %v1090 = vunpack.c.h.b16 %v1055
        %v1091 = vunpack.c.l.b16 %v1056
        %v1092 = vunpack.c.h.b16 %v1056
        %v1093 = vunpack.c.l.b16 %v1057
        %v1094 = vunpack.c.h.b16 %v1057
        %v1095 = vunpack.c.l.b16 %v1058
        %v1096 = vunpack.c.h.b16 %v1058
        %v1097 = vunpack.c.l.b16 %v1059
        %v1098 = vunpack.c.h.b16 %v1059
        %v1099 = vunpack.c.l.b16 %v1060
        %v1100 = vunpack.c.h.b16 %v1060
        %v1101 = vunpack.c.l.b16 %v1061
        %v1102 = vunpack.c.h.b16 %v1061
        %v1103 = vunpack.c.l.b16 %v1062
        %v1104 = vunpack.c.h.b16 %v1062
        %v1105 = vunpack.c.l.b16 %v1063
        %v1106 = vunpack.c.h.b16 %v1063
        %v1107 = vunpack.c.l.b16 %v1064
        %v1108 = vunpack.c.h.b16 %v1064
        %v1109 = vunpack.c.l.b16 %v1065
        %v1110 = vunpack.c.h.b16 %v1065
        %v1111 = vunpack.c.l.b16 %v1066
        %v1112 = vunpack.c.h.b16 %v1066
        %v1113 = vunpack.c.l.b16 %v1067
        %v1114 = vunpack.c.h.b16 %v1067
        %v1115 = vunpack.c.l.b16 %v1068
        %v1116 = vunpack.c.h.b16 %v1068
        %v1117 = vpack.c.b16 %v1085, %v1085
        %v1118 = vpack.c.b16 %v1086, %v1086
        %v1119 = vpack.c.b16 %v1087, %v1087
        %v1120 = vpack.c.b16 %v1088, %v1088
        %v1121 = vpack.c.b16 %v1089, %v1089
        %v1122 = vpack.c.b16 %v1090, %v1090
        %v1123 = vpack.c.b16 %v1091, %v1091
        %v1124 = vpack.c.b16 %v1092, %v1092
        %v1125 = vpack.c.b16 %v1093, %v1093
        %v1126 = vpack.c.b16 %v1094, %v1094
        %v1127 = vpack.c.b16 %v1095, %v1095
        %v1128 = vpack.c.b16 %v1096, %v1096
        %v1129 = vpack.c.b16 %v1097, %v1097
        %v1130 = vpack.c.b16 %v1098, %v1098
        %v1131 = vpack.c.b16 %v1099, %v1099
        %v1132 = vpack.c.b16 %v1100, %v1100
        %v1133 = vpack.c.b16 %v1101, %v1101
        %v1134 = vpack.c.b16 %v1102, %v1102
        %v1135 = vpack.c.b16 %v1103, %v1103
        %v1136 = vpack.c.b16 %v1104, %v1104
        %v1137 = vpack.c.b16 %v1105, %v1105
        %v1138 = vpack.c.b16 %v1106, %v1106
        %v1139 = vpack.c.b16 %v1107, %v1107
        %v1140 = vpack.c.b16 %v1108, %v1108
        %v1141 = vpack.c.b16 %v1109, %v1109
        %v1142 = vpack.c.b16 %v1110, %v1110
        %v1143 = vpack.c.b16 %v1111, %v1111
        %v1144 = vpack.c.b16 %v1112, %v1112
        %v1145 = vpack.c.b16 %v1113, %v1113
        %v1146 = vpack.c.b16 %v1114, %v1114
        %v1147 = vpack.c.b16 %v1115, %v1115
        %v1148 = vpack.c.b16 %v1116, %v1116
        %1181 = vst [vmem:[%s203] sm:$0xf] %v1117
        %1182 = vst [vmem:[%s203 + $0x4] sm:$0xf] %v1118
        %1183 = vst [vmem:[%s203 + $0x8] sm:$0xf] %v1119
        %1184 = vst [vmem:[%s203 + $0xc] sm:$0xf] %v1120
        %1185 = vst [vmem:[%s203 + $0x10] sm:$0xf] %v1121
        %1186 = vst [vmem:[%s203 + $0x14] sm:$0xf] %v1122
        %1187 = vst [vmem:[%s203 + $0x18] sm:$0xf] %v1123
        %1188 = vst [vmem:[%s203 + $0x1c] sm:$0xf] %v1124
        %1189 = vst [vmem:[%s203 + $0x20] sm:$0xf] %v1125
        %1190 = vst [vmem:[%s203 + $0x24] sm:$0xf] %v1126
        %1191 = vst [vmem:[%s203 + $0x28] sm:$0xf] %v1127
        %1192 = vst [vmem:[%s203 + $0x2c] sm:$0xf] %v1128
        %1193 = vst [vmem:[%s203 + $0x30] sm:$0xf] %v1129
        %1194 = vst [vmem:[%s203 + $0x34] sm:$0xf] %v1130
        %1195 = vst [vmem:[%s203 + $0x38] sm:$0xf] %v1131
        %1196 = vst [vmem:[%s203 + $0x3c] sm:$0xf] %v1132
        %1197 = vst [vmem:[%s203 + $0x40] sm:$0xf] %v1133
        %1198 = vst [vmem:[%s203 + $0x44] sm:$0xf] %v1134
        %1199 = vst [vmem:[%s203 + $0x48] sm:$0xf] %v1135
        %1200 = vst [vmem:[%s203 + $0x4c] sm:$0xf] %v1136
        %1201 = vst [vmem:[%s203 + $0x50] sm:$0xf] %v1137
        %1202 = vst [vmem:[%s203 + $0x54] sm:$0xf] %v1138
        %1203 = vst [vmem:[%s203 + $0x58] sm:$0xf] %v1139
        %1204 = vst [vmem:[%s203 + $0x5c] sm:$0xf] %v1140
        %1205 = vst [vmem:[%s203 + $0x60] sm:$0xf] %v1141
        %1206 = vst [vmem:[%s203 + $0x64] sm:$0xf] %v1142
        %1207 = vst [vmem:[%s203 + $0x68] sm:$0xf] %v1143
        %1208 = vst [vmem:[%s203 + $0x6c] sm:$0xf] %v1144
        %1209 = vst [vmem:[%s203 + $0x70] sm:$0xf] %v1145
        %1210 = vst [vmem:[%s203 + $0x74] sm:$0xf] %v1146
        %1211 = vst [vmem:[%s203 + $0x78] sm:$0xf] %v1147
        %1212 = vst [vmem:[%s203 + $0x7c] sm:$0xf] %v1148
        %s1213 = sand.u32 %s97, 1
        %s1214 = scalar_lea.sflag [#allocation4], %s1213
        %s1215 = sand.u32 %s97, 1
        %s1216 = smul.addr %s1215, 128
        %s1217 = scalar_lea.vmem [#allocation7], %s1216
        // Predicated region
        $region41: #{_residual_call.1} parent=31 // pred_check
          %p1218 = pneg %p107
        $region42: #{_residual_call.1} parent=31 // pred_check_branch
          %1220 = sbr.rel (%p1218) target = $region44
        $region43: #{_residual_call.1} parent=31 // pred_region
          %s1221 = smul.u32 32, %s21
          %s1223 = ssub.s32 2048, 2048
          %1224 = vsyncadd %s1214, %s1223
          %s1225 = smul.addr %s1221, 64
          %s1226 = scalar_lea.hbm %s3, %s1225
          %s1227 = sshll.u32 %s1217, 4
          %s1228 = int_to_ptr.vmem [resolvable:$true] %s1227
          %1233 = dma.vmem_to_hbm [thread:$0]  %s1228, 2048, %s1226, %s1214, 64, 64, 4
        $region44: #{_residual_call.1} parent=31 // pred_fallthru
          _
      $region32: #{_residual_call.1} parent=5 // pred_fallthru
        _
      %p1234 = scmp.le.s32.totalorder 2, %s16
      // Predicated region
      $region45: #{_residual_call.1} parent=5 // pred_check
        %p1235 = pneg %p1234
      $region46: #{_residual_call.1} parent=5 // pred_check_branch
        %1237 = sbr.rel (%p1235) target = $region48
      $region47: #{_residual_call.1} parent=5 // pred_region
        %s1238 = ssub.s32 %s16, 2
        // Predicated region
        $region49: #{_residual_call.1} parent=47 // pred_check
          %p1239 = pneg %p113
        $region50: #{_residual_call.1} parent=47 // pred_check_branch
          %1241 = sbr.rel (%p1239) target = $region52
        $region51: #{_residual_call.1} parent=47 // pred_region
          %s1242 = sand.u32 %s98, 1
          %s1243 = scalar_lea.sflag [#allocation4], %s1242
          %s1244 = sand.u32 %s98, 1
          %s1245 = smul.addr %s1244, 128
          %s1246 = scalar_lea.vmem [#allocation7], %s1245
          %1247 = dma.done %s1243, 2048
        $region52: #{_residual_call.1} parent=47 // pred_fallthru
          _
      $region48: #{_residual_call.1} parent=5 // pred_fallthru
        _
    $region6: #{_residual_call.1} parent=1 // loop_footer
      %s20 = sadd.s32 1, %s16
    $region7: #{_residual_call.1} parent=1 // loop_footer_branch
      %15 = sbr.rel target = $region3
    $region8: #{_residual_call.1} parent=1 // loop_exit
      _
    %1248 = vsyncpa [#allocation3], 1
    %s1249 = scalar_lea.sflag [#allocation3], 1
    %1250 = vsyncpa %s1249, 1
    %1251 = vsyncpa [#allocation6], 1
    %1252 = vsyncpa [#allocation4], 1
    %s1253 = scalar_lea.sflag [#allocation4], 1
    %1254 = vsyncpa %s1253, 1

</llo_original>
